<compile_context>
chip_gen: v5e
topology: v5e:2x2
jax: 0.10.0
libtpu: 0.0.40
codegen_flags: <defaults>
</compile_context>

<pallas_src>
import functools

import jax
import jax.numpy as jnp
import numpy as np
from jax import lax
from jax.experimental import pallas as pl
from jax.experimental.pallas import tpu as pltpu

LANES = 128
SUBLANES = 8
ROW_PAD = 16                     # pad rows to a multiple of 16 (bf16 sublane packing)
MAX_BLOCK_ROWS = 2048            # rows of the (rows, 128) slab per grid step (sweepable)
VMEM_LIMIT_BYTES = 32 * 1024 * 1024


def _num_tensorcore_splits():
    """2 on chips with two TensorCores per device (v7x); 1 on v5e/v6e."""
    try:
        kind = jax.devices()[0].device_kind.lower()
    except Exception:
        return 1
    return 2 if "v7" in kind else 1


def _edge_loss_kernel(x_ref, t_ref, out_ref, *, n_valid, block_rows,
                      tiles_total, tiles_per_split, last_tile_is_full,
                      mask_possible):
    """x_ref, t_ref: (block_rows, LANES) tiles in their native dtype.
    out_ref: (3, 8, LANES) f32 block, resident across the reduction axis:
      out_ref[0] += per-(sublane,lane) partial sum of (target != 0)
      out_ref[1] += partial sum of bce over all valid elements
      out_ref[2] += partial sum of bce over positive elements
    """
    c = pl.program_id(0)          # TensorCore split
    i = pl.program_id(1)          # tile within the split (reduction axis)

    @pl.when(i == 0)
    def _init():
        out_ref[...] = jnp.zeros_like(out_ref)

    tile_idx = c * tiles_per_split + i        # UNclamped global tile index
    sub = block_rows // SUBLANES

    def _accumulate(valid):
        x = x_ref[...].astype(jnp.float32)
        t = t_ref[...].astype(jnp.float32)
        pos = (t != 0.0).astype(jnp.float32)
        # Numerically stable BCE(sigmoid(x), t) with PyTorch's log clamp at -100:
        #   -log(sigmoid(x))     = softplus(-x)
        #   -log(1 - sigmoid(x)) = softplus(x)
        sp_x = jnp.maximum(x, 0.0) + jnp.log1p(jnp.exp(-jnp.abs(x)))   # softplus(x)
        bce_neg = jnp.minimum(sp_x, 100.0)         # -log(1-p), clamped
        bce_pos = jnp.minimum(sp_x - x, 100.0)     # -log(p),   clamped
        bce = bce_neg + t * (bce_pos - bce_neg)    # folded blend
        if valid is not None:
            # Zero the contribution of pad / OOB / duplicate-tile slots.
            pos = jnp.where(valid, pos, 0.0)
            bce = jnp.where(valid, bce, 0.0)
        bp = bce * pos
        # Full-vreg accumulation: reduce whole (8,128) vregs over the leading axis
        # (pure VALU); cross-sublane/lane reduction is deferred to the JAX glue.
        out_ref[0] += jnp.sum(pos.reshape(sub, SUBLANES, LANES), axis=0)
        out_ref[1] += jnp.sum(bce.reshape(sub, SUBLANES, LANES), axis=0)
        out_ref[2] += jnp.sum(bp.reshape(sub, SUBLANES, LANES), axis=0)

    if not mask_possible:
        # Every tile is completely valid: steady-state fast path only.
        _accumulate(None)
    else:
        # Only the last data tile (if not exactly full) and clamped overshoot
        # duplicates can hold invalid slots; everything else skips the mask.
        if last_tile_is_full:
            needs_mask = tile_idx >= tiles_total
        else:
            needs_mask = tile_idx >= tiles_total - 1

        @pl.when(jnp.logical_not(needs_mask))
        def _fast():
            _accumulate(None)

        @pl.when(needs_mask)
        def _masked():
            # Overflow-safe validity: compare row/lane separately (no flat index).
            full_rows = n_valid // LANES
            rem = n_valid % LANES
            row0 = tile_idx * block_rows
            rows_g = lax.broadcasted_iota(jnp.int32, (block_rows, LANES), 0) + row0
            lanes = lax.broadcasted_iota(jnp.int32, (block_rows, LANES), 1)
            valid = (rows_g < full_rows) | ((rows_g == full_rows) & (lanes < rem))
            _accumulate(valid)


def edge_loss(out, target):
    """Pallas implementation of EdgeLoss.forward(out, target)."""
    n = out.size
    x_flat = out.reshape(-1)
    t_flat = target.reshape(-1)

    # Pad the flat stream (only as needed) so it can be viewed as a lane-major
    # (rows, 128) slab with rows a multiple of 16; the padded slots are masked
    # out in-kernel (last tile only).
    slab = ROW_PAD * LANES
    n_pad = pl.cdiv(n, slab) * slab
    if n_pad != n:
        x_flat = jnp.pad(x_flat, (0, n_pad - n))
        t_flat = jnp.pad(t_flat, (0, n_pad - n))
    rows = n_pad // LANES
    x2 = x_flat.reshape(rows, LANES)
    t2 = t_flat.reshape(rows, LANES)

    block_rows = rows if rows <= MAX_BLOCK_ROWS else MAX_BLOCK_ROWS
    tiles_total = pl.cdiv(rows, block_rows)
    last_tile_is_full = (n == tiles_total * block_rows * LANES)

    num_splits = min(_num_tensorcore_splits(), tiles_total)
    tiles_per_split = pl.cdiv(tiles_total, num_splits)
    has_overshoot = (num_splits * tiles_per_split) > tiles_total
    mask_possible = (not last_tile_is_full) or has_overshoot

    def in_index_map(c, i):
        tile = c * tiles_per_split + i
        if num_splits > 1:
            # Clamp so the DMA never starts past the array end; clamped duplicate
            # tiles are suppressed by the in-kernel mask (UNclamped tile index).
            tile = jnp.minimum(tile, tiles_total - 1)
        return (tile, 0)

    if num_splits > 1:
        # TODO(synk): validate CORE_PARALLEL codegen on v7x hardware (guarded so
        # single-TC chips never take this path).
        core_parallel = getattr(pltpu, "CORE_PARALLEL", "parallel")
        dim_sem = (core_parallel, "arbitrary")
    else:
        dim_sem = ("arbitrary", "arbitrary")

    kernel = functools.partial(
        _edge_loss_kernel,
        n_valid=n,
        block_rows=block_rows,
        tiles_total=tiles_total,
        tiles_per_split=tiles_per_split,
        last_tile_is_full=last_tile_is_full,
        mask_possible=mask_possible,
    )

    bytes_in = n * (x2.dtype.itemsize + t2.dtype.itemsize)
    cost = pl.CostEstimate(
        flops=15 * n,
        transcendentals=2 * n,
        bytes_accessed=bytes_in + num_splits * 3 * SUBLANES * LANES * 4,
    )

    partial = pl.pallas_call(
        kernel,
        out_shape=jax.ShapeDtypeStruct((num_splits, 3, SUBLANES, LANES), jnp.float32),
        grid_spec=pltpu.PrefetchScalarGridSpec(
            num_scalar_prefetch=0,
            grid=(num_splits, tiles_per_split),
            in_specs=[
                pl.BlockSpec((block_rows, LANES), in_index_map),
                pl.BlockSpec((block_rows, LANES), in_index_map),
            ],
            out_specs=pl.BlockSpec((None, 3, SUBLANES, LANES),
                                   lambda c, i: (c, 0, 0, 0)),
        ),
        compiler_params=pltpu.CompilerParams(
            dimension_semantics=dim_sem,
            vmem_limit_bytes=VMEM_LIMIT_BYTES,
        ),
        cost_estimate=cost,
    )(x2, t2)

    # O(1) scalar assembly in plain JAX glue.
    sums = jnp.sum(partial, axis=(0, 2, 3))        # (3,)
    total = float(n)
    num_pos = sums[0]
    bce_all = sums[1]
    bce_pos = sums[2]
    bce_neg = bce_all - bce_pos
    num_neg = total - num_pos

    # PyTorch does two sequential masked assignments:
    #   mask[mask != 0] = num_neg / total   (weight for positives)
    #   mask[mask == 0] = num_pos / total   (weight for negatives)
    # If num_neg == 0 the first writes 0.0, so the second overwrites the positive
    # positions too. Replicate that quirk exactly:
    w_pos = num_neg / total
    w_neg = num_pos / total
    w_pos = jnp.where(w_pos == 0.0, w_neg, w_pos)

    return (w_pos * bce_pos + w_neg * bce_neg) / total


def edge_loss_ref(out, target):
    """Pure-JAX reference mirroring the PyTorch semantics (for verification)."""
    out = out.astype(jnp.float32)
    t = target.astype(jnp.float32)
    mask = (t != 0).astype(jnp.float32)
    total = float(mask.size)
    num_pos = jnp.sum(mask)
    num_neg = total - num_pos
    w_pos = num_neg / total
    w_neg = num_pos / total
    w_pos = jnp.where(w_pos == 0.0, w_neg, w_pos)
    w = jnp.where(mask != 0, w_pos, w_neg)
    p = jax.nn.sigmoid(out)
    log_p = jnp.maximum(jnp.log(p), -100.0)
    log_1mp = jnp.maximum(jnp.log1p(-p), -100.0)
    bce = -(t * log_p + (1.0 - t) * log_1mp)
    return jnp.mean(w * bce)


if __name__ == "__main__":
    key = jax.random.PRNGKey(0)

    cases = [
        ((2, 4, 16, 16), jnp.float32),     # NCHW like the PyTorch module; one exact tile
        ((1, 1, 30, 173), jnp.float32),    # ragged tail (n % 128 != 0), masked path
        ((3, 4, 161, 161), jnp.bfloat16),  # multi-tile + partial last block, bf16 logits
    ]
    for shape, dt in cases:
        k_out, k_tgt, key = jax.random.split(key, 3)
        logits = jax.random.normal(k_out, shape, dtype=jnp.float32).astype(dt)
        target = jax.random.bernoulli(k_tgt, p=0.15, shape=shape).astype(jnp.float32)

        loss = jax.block_until_ready(edge_loss(logits, target))
        loss_ref = jax.block_until_ready(edge_loss_ref(logits, target))
        np.testing.assert_allclose(np.asarray(loss), np.asarray(loss_ref),
                                   rtol=1e-4, atol=1e-6)

    print("KERNEL_OK")
</pallas_src>

<mosaic_0001>
module attributes {stable_mosaic.version = 11 : i64} {
  func.func @_edge_loss_kernel(%arg0: i32, %arg1: i32, %arg2: memref<16x128xf32, #tpu.memory_space<vmem>>, %arg3: memref<16x128xf32, #tpu.memory_space<vmem>>, %arg4: memref<1x3x8x128xf32, #tpu.memory_space<vmem>>) attributes {dimension_semantics = [#tpu.dimension_semantics<arbitrary>, #tpu.dimension_semantics<arbitrary>], iteration_bounds = array<i64: 1, 1>, scalar_prefetch = 0 : i64, scratch_operands = 0 : i64, tpu.core_type = #tpu.core_type<tc>, window_params = [{transform_indices = @transform_0, window_bounds = array<i64: 16, 128>}, {transform_indices = @transform_1, window_bounds = array<i64: 16, 128>}, {transform_indices = @transform_2, window_bounds = array<i64: 1, 3, 8, 128>}]} {
    %c0_i32 = arith.constant 0 : i32
    %0 = arith.cmpi eq, %arg1, %c0_i32 : i32
    %1 = arith.extui %0 : i1 to i32
    %c0_i32_0 = arith.constant 0 : i32
    %2 = arith.cmpi ne, %1, %c0_i32_0 : i32
    scf.if %2 {
      %cst_33 = arith.constant 0.000000e+00 : f32
      %50 = vector.broadcast %cst_33 : f32 to vector<3x8x128xf32>
      %c0_34 = arith.constant 0 : index
      %c0_35 = arith.constant 0 : index
      %c0_36 = arith.constant 0 : index
      %c0_37 = arith.constant 0 : index
      %51 = vector.load %arg4[%c0_34, %c0_35, %c0_36, %c0_37] : memref<1x3x8x128xf32, #tpu.memory_space<vmem>>, vector<1x3x8x128xf32>
      %52 = vector.shape_cast %51 : vector<1x3x8x128xf32> to vector<3x8x128xf32>
      %53 = vector.shape_cast %50 : vector<3x8x128xf32> to vector<1x3x8x128xf32>
      tpu.vector_store %arg4[%c0_34, %c0_35, %c0_36, %c0_37], %53 {strides = array<i32>} : memref<1x3x8x128xf32, #tpu.memory_space<vmem>>, vector<1x3x8x128xf32>,
    } else {
    }
    %c0 = arith.constant 0 : index
    %c0_1 = arith.constant 0 : index
    %3 = vector.load %arg2[%c0, %c0_1] : memref<16x128xf32, #tpu.memory_space<vmem>>, vector<16x128xf32>
    %c0_2 = arith.constant 0 : index
    %c0_3 = arith.constant 0 : index
    %4 = vector.load %arg3[%c0_2, %c0_3] : memref<16x128xf32, #tpu.memory_space<vmem>>, vector<16x128xf32>
    %cst = arith.constant 0.000000e+00 : f32
    %5 = vector.broadcast %cst : f32 to vector<16x128xf32>
    %6 = arith.cmpf one, %4, %5 : vector<16x128xf32>
    %7 = arith.extui %6 : vector<16x128xi1> to vector<16x128xi32>
    %8 = arith.sitofp %7 : vector<16x128xi32> to vector<16x128xf32>
    %cst_4 = arith.constant 0.000000e+00 : f32
    %9 = vector.broadcast %cst_4 : f32 to vector<16x128xf32>
    %10 = arith.maximumf %3, %9 : vector<16x128xf32>
    %11 = math.absf %3 : vector<16x128xf32>
    %cst_5 = arith.constant 0.000000e+00 : f32
    %12 = vector.broadcast %cst_5 : f32 to vector<16x128xf32>
    %13 = arith.subf %12, %11 : vector<16x128xf32>
    %14 = math.exp %13 : vector<16x128xf32>
    %15 = math.log1p %14 : vector<16x128xf32>
    %16 = arith.addf %10, %15 : vector<16x128xf32>
    %cst_6 = arith.constant 1.000000e+02 : f32
    %17 = vector.broadcast %cst_6 : f32 to vector<16x128xf32>
    %18 = arith.minimumf %16, %17 : vector<16x128xf32>
    %19 = arith.subf %16, %3 : vector<16x128xf32>
    %cst_7 = arith.constant 1.000000e+02 : f32
    %20 = vector.broadcast %cst_7 : f32 to vector<16x128xf32>
    %21 = arith.minimumf %19, %20 : vector<16x128xf32>
    %22 = arith.subf %21, %18 : vector<16x128xf32>
    %23 = arith.mulf %4, %22 : vector<16x128xf32>
    %24 = arith.addf %18, %23 : vector<16x128xf32>
    %25 = arith.mulf %24, %8 : vector<16x128xf32>
    %c0_8 = arith.constant 0 : index
    %c0_9 = arith.constant 0 : index
    %c0_10 = arith.constant 0 : index
    %c0_11 = arith.constant 0 : index
    %26 = vector.load %arg4[%c0_8, %c0_9, %c0_10, %c0_11] : memref<1x3x8x128xf32, #tpu.memory_space<vmem>>, vector<1x1x8x128xf32>
    %27 = vector.shape_cast %26 : vector<1x1x8x128xf32> to vector<8x128xf32>
    %28 = vector.shape_cast %8 : vector<16x128xf32> to vector<2x8x128xf32>
    %cst_12 = arith.constant dense<0.000000e+00> : vector<8x128xf32>
    %29 = vector.multi_reduction <add>, %28, %cst_12 [0] : vector<2x8x128xf32> to vector<8x128xf32>
    %30 = arith.addf %27, %29 : vector<8x128xf32>
    %c0_13 = arith.constant 0 : index
    %c0_14 = arith.constant 0 : index
    %c0_15 = arith.constant 0 : index
    %c0_16 = arith.constant 0 : index
    %31 = vector.load %arg4[%c0_13, %c0_14, %c0_15, %c0_16] : memref<1x3x8x128xf32, #tpu.memory_space<vmem>>, vector<1x1x8x128xf32>
    %32 = vector.shape_cast %31 : vector<1x1x8x128xf32> to vector<8x128xf32>
    %33 = vector.shape_cast %30 : vector<8x128xf32> to vector<1x1x8x128xf32>
    tpu.vector_store %arg4[%c0_13, %c0_14, %c0_15, %c0_16], %33 {strides = array<i32>} : memref<1x3x8x128xf32, #tpu.memory_space<vmem>>, vector<1x1x8x128xf32>,
    %c0_17 = arith.constant 0 : index
    %c1 = arith.constant 1 : index
    %c0_18 = arith.constant 0 : index
    %c0_19 = arith.constant 0 : index
    %34 = vector.load %arg4[%c0_17, %c1, %c0_18, %c0_19] : memref<1x3x8x128xf32, #tpu.memory_space<vmem>>, vector<1x1x8x128xf32>
    %35 = vector.shape_cast %34 : vector<1x1x8x128xf32> to vector<8x128xf32>
    %36 = vector.shape_cast %24 : vector<16x128xf32> to vector<2x8x128xf32>
    %cst_20 = arith.constant dense<0.000000e+00> : vector<8x128xf32>
    %37 = vector.multi_reduction <add>, %36, %cst_20 [0] : vector<2x8x128xf32> to vector<8x128xf32>
    %38 = arith.addf %35, %37 : vector<8x128xf32>
    %c0_21 = arith.constant 0 : index
    %c1_22 = arith.constant 1 : index
    %c0_23 = arith.constant 0 : index
    %c0_24 = arith.constant 0 : index
    %39 = vector.load %arg4[%c0_21, %c1_22, %c0_23, %c0_24] : memref<1x3x8x128xf32, #tpu.memory_space<vmem>>, vector<1x1x8x128xf32>
    %40 = vector.shape_cast %39 : vector<1x1x8x128xf32> to vector<8x128xf32>
    %41 = vector.shape_cast %38 : vector<8x128xf32> to vector<1x1x8x128xf32>
    tpu.vector_store %arg4[%c0_21, %c1_22, %c0_23, %c0_24], %41 {strides = array<i32>} : memref<1x3x8x128xf32, #tpu.memory_space<vmem>>, vector<1x1x8x128xf32>,
    %c0_25 = arith.constant 0 : index
    %c2 = arith.constant 2 : index
    %c0_26 = arith.constant 0 : index
    %c0_27 = arith.constant 0 : index
    %42 = vector.load %arg4[%c0_25, %c2, %c0_26, %c0_27] : memref<1x3x8x128xf32, #tpu.memory_space<vmem>>, vector<1x1x8x128xf32>
    %43 = vector.shape_cast %42 : vector<1x1x8x128xf32> to vector<8x128xf32>
    %44 = vector.shape_cast %25 : vector<16x128xf32> to vector<2x8x128xf32>
    %cst_28 = arith.constant dense<0.000000e+00> : vector<8x128xf32>
    %45 = vector.multi_reduction <add>, %44, %cst_28 [0] : vector<2x8x128xf32> to vector<8x128xf32>
    %46 = arith.addf %43, %45 : vector<8x128xf32>
    %c0_29 = arith.constant 0 : index
    %c2_30 = arith.constant 2 : index
    %c0_31 = arith.constant 0 : index
    %c0_32 = arith.constant 0 : index
    %47 = vector.load %arg4[%c0_29, %c2_30, %c0_31, %c0_32] : memref<1x3x8x128xf32, #tpu.memory_space<vmem>>, vector<1x1x8x128xf32>
    %48 = vector.shape_cast %47 : vector<1x1x8x128xf32> to vector<8x128xf32>
    %49 = vector.shape_cast %46 : vector<8x128xf32> to vector<1x1x8x128xf32>
    tpu.vector_store %arg4[%c0_29, %c2_30, %c0_31, %c0_32], %49 {strides = array<i32>} : memref<1x3x8x128xf32, #tpu.memory_space<vmem>>, vector<1x1x8x128xf32>,
    return
  }
  func.func @transform_0(%arg0: i32, %arg1: i32) -> (i32, i32) {
    %c1_i32 = arith.constant 1 : i32
    %0 = arith.muli %arg0, %c1_i32 : i32
    %1 = arith.addi %0, %arg1 : i32
    %c0_i32 = arith.constant 0 : i32
    %c0_i32_0 = arith.constant 0 : i32
    return %1, %c0_i32 : i32, i32
  }
  func.func @transform_1(%arg0: i32, %arg1: i32) -> (i32, i32) {
    %c1_i32 = arith.constant 1 : i32
    %0 = arith.muli %arg0, %c1_i32 : i32
    %1 = arith.addi %0, %arg1 : i32
    %c0_i32 = arith.constant 0 : i32
    %c0_i32_0 = arith.constant 0 : i32
    return %1, %c0_i32 : i32, i32
  }
  func.func @transform_2(%arg0: i32, %arg1: i32) -> (i32, i32, i32, i32) {
    %c0_i32 = arith.constant 0 : i32
    %c0_i32_0 = arith.constant 0 : i32
    %c0_i32_1 = arith.constant 0 : i32
    %c0_i32_2 = arith.constant 0 : i32
    return %arg0, %c0_i32, %c0_i32_0, %c0_i32_1 : i32, i32, i32, i32
  }
}

</mosaic_0001>

<llo_original>
// kernel: tpu_custom_call.1
$region0: #{tpu_custom_call.1}
  #allocation0 [shape = 'u32[]', space=smem, size = 0x4, offset = 0x4, fixed_abs, tag = 'smem constant byte address 0x4 - core index']
  #allocation1 [shape = 'u32[72,128]{1,0:T(1,128)}', space=vmem, size = 0x9000, scoped, tag = 'internal scratch']
  %s0 = inlined_call_operand.hbm [shape: f32[16,128], index: 0, kind: input, shape index: {}]
  %s1 = inlined_call_operand.hbm [shape: f32[16,128], index: 1, kind: input, shape index: {}]
  %s2 = inlined_call_operand.hbm [shape: f32[1,3,8,128], index: 2, kind: output, shape index: {}]
  %s3 = sld [smem:[#allocation0]]
  $region30: #{tpu_custom_call.1} parent=0
    _
  %s5 = ssub.s32 1, %s3
  %s6 = scalar_select 0, %s5, %s3
  $region1: #{tpu_custom_call.1} parent=0
    #allocation2 [shape = 'u8[8192]{0}', space=vmem, size = 0x2000, scoped, tag = 'input window, operand 0, single buffered']
    #allocation3 [shape = 's32[1]{0}', space=sflag, size = 0x4, scoped, tag = 'scoped memory for tpu_custom_call.1']
    #allocation4 [shape = 's32[1]{0}', space=sflag, size = 0x4, scoped, tag = 'scoped memory for tpu_custom_call.1']
    #allocation5 [shape = 'u8[8192]{0}', space=vmem, size = 0x2000, scoped, tag = 'input window, operand 1, single buffered']
    #allocation6 [shape = 's32[1]{0}', space=sflag, size = 0x4, scoped, tag = 'scoped memory for tpu_custom_call.1']
    #allocation7 [shape = 'u8[12288]{0}', space=vmem, size = 0x3000, scoped, tag = 'output window, operand 0, single buffered']
    %7 = vsyncpa [#allocation3], 0
    %8 = vsyncpa [#allocation6], 0
    %9 = vsyncpa [#allocation4], 0
    // Predicated region
    $region2: #{tpu_custom_call.1} parent=1 // pred_check
      _
    $region3: #{tpu_custom_call.1} parent=1 // pred_check_branch
      %11 = sbr.rel (0) target = $region5
    $region4: #{tpu_custom_call.1} parent=1 // pred_region
      %s12 = sadd.s32 0, 0
      %s13 = smul.u32 2, %s12
      %15 = vsyncadd [#allocation3], 0
      %s16 = smul.addr %s13, 8
      %s17 = scalar_lea.hbm %s0, %s16
      %s18 = sshll.u32 %s17, 4
      %s19 = int_to_ptr.hbm [resolvable:$true] %s18
      %s20 = sshll.u32 [#allocation2], 4
      %s21 = int_to_ptr.vmem [resolvable:$true] %s20
      %26 = dma.hbm_to_vmem [thread:$0]  %s19, 256, %s21, [#allocation3], 128, 128, 8
    $region5: #{tpu_custom_call.1} parent=1 // pred_fallthru
      _
    // Predicated region
    $region6: #{tpu_custom_call.1} parent=1 // pred_check
      _
    $region7: #{tpu_custom_call.1} parent=1 // pred_check_branch
      %28 = sbr.rel (0) target = $region9
    $region8: #{tpu_custom_call.1} parent=1 // pred_region
      %s29 = sadd.s32 0, 0
      %s30 = smul.u32 2, %s29
      %32 = vsyncadd [#allocation6], 0
      %s33 = smul.addr %s30, 8
      %s34 = scalar_lea.hbm %s1, %s33
      %s35 = sshll.u32 %s34, 4
      %s36 = int_to_ptr.hbm [resolvable:$true] %s35
      %s37 = sshll.u32 [#allocation5], 4
      %s38 = int_to_ptr.vmem [resolvable:$true] %s37
      %43 = dma.hbm_to_vmem [thread:$0]  %s36, 256, %s38, [#allocation6], 128, 128, 8
    $region9: #{tpu_custom_call.1} parent=1 // pred_fallthru
      _
    // Predicated region
    $region10: #{tpu_custom_call.1} parent=1 // pred_check
      _
    $region11: #{tpu_custom_call.1} parent=1 // pred_check_branch
      %45 = sbr.rel (0) target = $region13
    $region12: #{tpu_custom_call.1} parent=1 // pred_region
      %47 = dma.done [#allocation3], 256
    $region13: #{tpu_custom_call.1} parent=1 // pred_fallthru
      _
    // Predicated region
    $region14: #{tpu_custom_call.1} parent=1 // pred_check
      _
    $region15: #{tpu_custom_call.1} parent=1 // pred_check_branch
      %49 = sbr.rel (0) target = $region17
    $region16: #{tpu_custom_call.1} parent=1 // pred_region
      %51 = dma.done [#allocation6], 256
    $region17: #{tpu_custom_call.1} parent=1 // pred_fallthru
      _
    %s52 = sadd.s32 0, 0
    %s53 = smul.u32 2, %s52
    %s54 = sadd.s32 0, 0
    %s55 = smul.u32 2, %s54
    %p56 = scmp.eq.s32.totalorder 0, 0
    // Predicated region
    $region18: #{tpu_custom_call.1} parent=1 // pred_check
      %p57 = pneg %p56
    $region19: #{tpu_custom_call.1} parent=1 // pred_check_branch
      %59 = sbr.rel (%p57) target = $region21
    $region20: #{tpu_custom_call.1} parent=1 // pred_region
      %60 = vst [vmem:[#allocation7] sm:$0xff] 0.0
      %61 = vst [vmem:[#allocation7 + $0x8] sm:$0xff] 0.0
      %62 = vst [vmem:[#allocation7 + $0x10] sm:$0xff] 0.0
    $region21: #{tpu_custom_call.1} parent=1 // pred_fallthru
      _
    %v63 = vld [vmem:[#allocation2] sm:$0xff]
    %v64 = vld [vmem:[#allocation2 + $0x8] sm:$0xff]
    %v65 = vld [vmem:[#allocation5] sm:$0xff]
    %v66 = vld [vmem:[#allocation5 + $0x8] sm:$0xff]
    %vm67 = vcmp.ne.f32.partialorder %v65, 0.0
    %vm68 = vcmp.ne.f32.partialorder %v66, 0.0
    %v69 = vsel %vm67, 1, 0
    %v70 = vsel %vm68, 1, 0
    %v71 = vcvt.s32.f32 %v69
    %v72 = vcvt.s32.f32 %v70
    %v73 = vmax.f32 %v63, 0.0
    %v74 = vmax.f32 %v64, 0.0
    %v75 = vand.u32 2147483647, %v63
    %v76 = vand.u32 2147483647, %v64
    %v77 = vsub.f32 0.0, %v75
    %v78 = vsub.f32 0.0, %v76
    %v79 = vmul.f32 %v77, 1.442695
    %v80 = vpow.pop %v79
    %v81 = vmul.f32 %v78, 1.442695
    %v82 = vpow.pop %v81
    %v83 = vadd.f32 %v80, 1.0
    %v84 = vlog2.pop %v83
    %v85 = vmul.f32 %v84, 0.6931472
    %v86 = vmul.f32 -0.5, %v80
    %v87 = vadd.f32 %v86, 1.0
    %v88 = vmul.f32 %v87, %v80
    %v89 = vand.u32 2147483647, %v80
    %vm90 = vcmp.lt.f32.partialorder %v89, 0.0004427343
    %v91 = vsel %vm90, %v88, %v85
    %v92 = vadd.f32 %v82, 1.0
    %v93 = vlog2.pop %v92
    %v94 = vmul.f32 %v93, 0.6931472
    %v95 = vmul.f32 -0.5, %v82
    %v96 = vadd.f32 %v95, 1.0
    %v97 = vmul.f32 %v96, %v82
    %v98 = vand.u32 2147483647, %v82
    %vm99 = vcmp.lt.f32.partialorder %v98, 0.0004427343
    %v100 = vsel %vm99, %v97, %v94
    %v101 = vadd.f32 %v73, %v91
    %v102 = vadd.f32 %v74, %v100
    %v103 = vmin.f32 %v101, 100.0
    %v104 = vmin.f32 %v102, 100.0
    %v105 = vsub.f32 %v101, %v63
    %v106 = vsub.f32 %v102, %v64
    %v107 = vmin.f32 %v105, 100.0
    %v108 = vmin.f32 %v106, 100.0
    %v109 = vsub.f32 %v107, %v103
    %v110 = vsub.f32 %v108, %v104
    %v111 = vmul.f32 %v65, %v109
    %v112 = vmul.f32 %v66, %v110
    %v113 = vadd.f32 %v103, %v111
    %v114 = vadd.f32 %v104, %v112
    %v115 = vmul.f32 %v113, %v71
    %v116 = vmul.f32 %v114, %v72
    %v117 = vld [vmem:[#allocation7] sm:$0xff]
    %v118 = vadd.f32 %v71, %v72
    %v119 = vadd.f32 %v117, %v118
    %120 = vst [vmem:[#allocation7] sm:$0xff] %v119
    %s121 = scalar_lea.vmem [#allocation7], 8
    %v122 = vld [vmem:[%s121] sm:$0xff]
    %v123 = vadd.f32 %v113, %v114
    %v124 = vadd.f32 %v122, %v123
    %125 = vst [vmem:[%s121] sm:$0xff] %v124
    %s126 = scalar_lea.vmem [#allocation7], 16
    %v127 = vld [vmem:[%s126] sm:$0xff]
    %v128 = vadd.f32 %v115, %v116
    %v129 = vadd.f32 %v127, %v128
    %130 = vst [vmem:[%s126] sm:$0xff] %v129
    // Predicated region
    $region22: #{tpu_custom_call.1} parent=1 // pred_check
      _
    $region23: #{tpu_custom_call.1} parent=1 // pred_check_branch
      %132 = sbr.rel (0) target = $region25
    $region24: #{tpu_custom_call.1} parent=1 // pred_region
      %134 = vsyncadd [#allocation4], 0
      %s135 = sshll.u32 [#allocation7], 4
      %s136 = int_to_ptr.vmem [resolvable:$true] %s135
      %s137 = sshll.u32 %s2, 4
      %s138 = int_to_ptr.hbm [resolvable:$true] %s137
      %143 = dma.vmem_to_hbm [thread:$0]  %s136, 384, %s138, [#allocation4], 128, 128, 8
    $region25: #{tpu_custom_call.1} parent=1 // pred_fallthru
      _
    // Predicated region
    $region26: #{tpu_custom_call.1} parent=1 // pred_check
      _
    $region27: #{tpu_custom_call.1} parent=1 // pred_check_branch
      %145 = sbr.rel (0) target = $region29
    $region28: #{tpu_custom_call.1} parent=1 // pred_region
      %147 = dma.done [#allocation4], 384
    $region29: #{tpu_custom_call.1} parent=1 // pred_fallthru
      _
    %148 = vsyncpa [#allocation3], 1
    %149 = vsyncpa [#allocation6], 1
    %150 = vsyncpa [#allocation4], 1

</llo_original>
